<compile_context>
chip_gen: v7x
topology: tpu7x:2x2x1
jax: 0.10.0
libtpu: 0.0.40
codegen_flags: <defaults>
</compile_context>

<pallas_src>
import functools

import jax
import jax.numpy as jnp
import numpy as np
from jax.experimental import pallas as pl
from jax.experimental.pallas import tpu as pltpu

_NEG_BIG = -1e30  # plain Python float -> lowered as a literal (no captured constant)


def _ntxent_kernel(z_ref, out_ref, *, bs, n, block_rows, inv_temp):
    """One grid step: per-row NT-Xent losses for `block_rows` rows of z = [zi; zj]."""
    i = pl.program_id(0)
    n_pad = z_ref.shape[0]  # padded 2B (static)

    # Query rows are a slice of the already-resident keys ref: no second HBM stream.
    start = pl.multiple_of(i * block_rows, block_rows)
    # Fold 1/temperature into the small (block_rows, D) tile, not the big sim tile.
    q = z_ref[pl.ds(start, block_rows), :] * inv_temp

    # Similarity tile on the MXU (bf16 x bf16 -> f32 accumulate).  Contraction
    # ((1,),(1,)) is the standard q @ k^T flash-attention pattern; no per-step
    # keys transpose is emitted (verify with pl.lower_as_mlir if in doubt).
    s = jax.lax.dot_general(
        q, z_ref[...], (((1,), (1,)), ((), ())),
        preferred_element_type=jnp.float32,
    )  # (block_rows, n_pad), f32

    # One full-tile lane iota; row indices are a cheap (block_rows, 1) column.
    col = jax.lax.broadcasted_iota(jnp.int32, s.shape, 1)
    row = i * block_rows + jax.lax.broadcasted_iota(jnp.int32, (block_rows, 1), 0)

    # Positive logit: partner row is r + bs (first half) or r - bs (second half).
    pos_col = jnp.where(row < bs, row + bs, row - bs)          # (block_rows, 1)
    pos_val = jnp.sum(jnp.where(col == pos_col, s, 0.0), axis=1, keepdims=True)

    # Exclude the self-similarity column (and zero-padded key rows) from the LSE.
    drop = col == row
    if n_pad != n:  # static: only emit the extra compare when padding exists
        drop = drop | (col >= n)
    s_neg = jnp.where(drop, _NEG_BIG, s)

    m = jnp.max(s_neg, axis=1, keepdims=True)
    lse = jnp.log(jnp.sum(jnp.exp(s_neg - m), axis=1, keepdims=True)) + m

    out_ref[...] = lse - pos_val  # (block_rows, 1) per-row losses


def _l2_normalize(x, eps=1e-12):
    # Matches F.normalize(x, p=2, dim=-1): x / max(||x||, eps).
    norm = jnp.sqrt(jnp.sum(x * x, axis=-1, keepdims=True))
    return x / jnp.maximum(norm, eps)


def simclr_loss(zi, zj, *, normalize=False, temperature=1.0, block_rows=None,
                compute_dtype=jnp.bfloat16):
    """Pallas NT-Xent loss matching SimclrLoss.forward(zi, zj)."""
    bs, d = zi.shape
    assert zj.shape == (bs, d)
    n = 2 * bs

    if normalize:
        zi = _l2_normalize(zi.astype(jnp.float32))
        zj = _l2_normalize(zj.astype(jnp.float32))

    # --- tile sizing -------------------------------------------------------
    # The per-step f32 elementwise temporaries (s, masks, exp tile, ...) scale as
    # ~6 * block_rows * 2B * 4 bytes and dwarf the BlockSpec buffers for large 2B.
    # Budget them to ~12 MiB so we sit under the 16/32 MiB scoped-VMEM defaults
    # (v5e/v7x); v6e (128 MiB) can go bigger — re-derive per generation for prod.
    itemsize = jnp.dtype(compute_dtype).itemsize
    row_align = 16 if itemsize < 4 else 8  # sublane packing for sub-32-bit dtypes
    if block_rows is None:
        block_rows = ((12 << 20) // (6 * 4 * max(n, 1))) // row_align * row_align
        block_rows = int(max(row_align, min(256, block_rows)))
    block_rows = int(max(row_align, -(-int(block_rows) // row_align) * row_align))

    # Never collapse to a single n x n tile: pad rows up to a multiple of
    # block_rows and mask the padded key columns inside the kernel.
    num_blocks = -(-n // block_rows)
    n_pad = num_blocks * block_rows

    z = jnp.concatenate([zi, zj], axis=0).astype(compute_dtype)  # (2B, D) bf16
    if n_pad != n:
        z = jnp.pad(z, ((0, n_pad - n), (0, 0)))

    kernel = functools.partial(
        _ntxent_kernel, bs=bs, n=n, block_rows=block_rows,
        inv_temp=float(1.0 / temperature),
    )

    keys_bytes = n_pad * d * itemsize
    temps_bytes = 6 * block_rows * n_pad * 4
    vmem_limit = int(min(max(keys_bytes + temps_bytes + (4 << 20), 32 << 20), 64 << 20))

    row_losses = pl.pallas_call(
        kernel,
        out_shape=jax.ShapeDtypeStruct((n_pad, 1), jnp.float32),
        grid_spec=pltpu.PrefetchScalarGridSpec(
            num_scalar_prefetch=0,
            grid=(num_blocks,),
            in_specs=[
                # Full keys, VMEM-resident across the whole grid (constant index
                # map); single-buffered since it never changes.
                pl.BlockSpec((n_pad, d), lambda i: (0, 0),
                             pipeline_mode=pl.Buffered(1)),
            ],
            out_specs=pl.BlockSpec((block_rows, 1), lambda i: (i, 0)),
        ),
        compiler_params=pltpu.CompilerParams(
            dimension_semantics=("parallel",),  # independent row blocks (megacore)
            vmem_limit_bytes=vmem_limit,
        ),
    )(z)

    # Padded rows are discarded; mean over the true 2B rows only.
    return jnp.mean(row_losses[:n, 0])


def _simclr_ref_np(zi, zj, *, normalize, temperature, quantize_bf16=True):
    """Independent NumPy reference mirroring the PyTorch construction exactly.

    When quantize_bf16 is True the (normalized) inputs are rounded to bf16 first,
    matching the kernel's bf16 operand / f32-accumulate compute path; all logits
    math is then done in float64.
    """
    zi = np.asarray(zi, np.float32)
    zj = np.asarray(zj, np.float32)
    bs = zi.shape[0]
    if normalize:
        zi = zi / np.maximum(np.linalg.norm(zi, axis=-1, keepdims=True), 1e-12)
        zj = zj / np.maximum(np.linalg.norm(zj, axis=-1, keepdims=True), 1e-12)
    if quantize_bf16:
        q = lambda a: np.asarray(
            jnp.asarray(a, jnp.float32).astype(jnp.bfloat16).astype(jnp.float32),
            np.float64)
        zi, zj = q(zi), q(zj)
    else:
        zi, zj = zi.astype(np.float64), zj.astype(np.float64)
    ii = zi @ zi.T / temperature
    ij = zi @ zj.T / temperature
    ji = zj @ zi.T / temperature
    jj = zj @ zj.T / temperature
    mask = ~np.eye(bs, dtype=bool)
    offd = lambda m: m[mask].reshape(bs, bs - 1)
    pos = np.concatenate([np.diag(ij), np.diag(ji)])[:, None]
    neg_i = np.concatenate([offd(ii), offd(ij)], axis=1)
    neg_j = np.concatenate([offd(ji), offd(jj)], axis=1)
    neg = np.concatenate([neg_i, neg_j], axis=0)
    logits = np.concatenate([pos, neg], axis=1)
    m = logits.max(axis=1, keepdims=True)
    logp = logits - (np.log(np.exp(logits - m).sum(axis=1, keepdims=True)) + m)
    return float(-logp[:, 0].mean())


if __name__ == "__main__":
    key = jax.random.PRNGKey(0)
    k_i, k_j, k_i2, k_j2 = jax.random.split(key, 4)

    BS, D = 16, 32                    # small shapes: 2*BS = 32 rows, hidden = 32
    zi = jax.random.normal(k_i, (BS, D), dtype=jnp.float32)
    zj = jax.random.normal(k_j, (BS, D), dtype=jnp.float32)

    # 1) Default module config (normalize=False, temperature=1.0); block_rows=16
    #    so the grid actually has 2 steps even at this tiny size.
    loss0 = jax.block_until_ready(simclr_loss(zi, zj, block_rows=16))
    ref0 = _simclr_ref_np(zi, zj, normalize=False, temperature=1.0)
    assert np.allclose(float(loss0), ref0, atol=2e-3, rtol=1e-4), (float(loss0), ref0)

    # 2) Normalized + temperature path (power-of-two temperature keeps the
    #    in-kernel bf16 q-scale exact).
    loss1 = jax.block_until_ready(
        simclr_loss(zi, zj, normalize=True, temperature=0.5, block_rows=16))
    ref1 = _simclr_ref_np(zi, zj, normalize=True, temperature=0.5)
    assert np.allclose(float(loss1), ref1, atol=1e-2, rtol=1e-4), (float(loss1), ref1)

    # 3) Batch not divisible by block_rows: exercises row padding, padded-key-column
    #    masking, and a row block straddling the zi/zj boundary.
    BS3 = 12
    zi3 = jax.random.normal(k_i2, (BS3, D), dtype=jnp.float32)
    zj3 = jax.random.normal(k_j2, (BS3, D), dtype=jnp.float32)
    loss2 = jax.block_until_ready(simclr_loss(zi3, zj3, block_rows=16))
    ref2 = _simclr_ref_np(zi3, zj3, normalize=False, temperature=1.0)
    assert np.allclose(float(loss2), ref2, atol=2e-3, rtol=1e-4), (float(loss2), ref2)

    print("KERNEL_OK")
</pallas_src>

<mosaic_0001>
module attributes {stable_mosaic.version = 11 : i64} {
  func.func @_ntxent_kernel(%arg0: i32, %arg1: memref<32x32xbf16, #tpu.memory_space<vmem>>, %arg2: memref<16x1xf32, #tpu.memory_space<vmem>>) attributes {dimension_semantics = [#tpu.dimension_semantics<parallel>], iteration_bounds = array<i64: 2>, scalar_prefetch = 0 : i64, scratch_operands = 0 : i64, tpu.core_type = #tpu.core_type<tc>, window_params = [{pipeline_mode = #tpu.pipeline_mode<synchronous>, transform_indices = @transform_0, window_bounds = array<i64: 32, 32>}, {transform_indices = @transform_1, window_bounds = array<i64: 16, 1>}]} {
    %c16_i32 = arith.constant 16 : i32
    %0 = arith.muli %arg0, %c16_i32 : i32
    %1 = tpu.assume_multiple %0, 16 : i32
    %2 = arith.index_cast %1 : i32 to index
    %c0 = arith.constant 0 : index
    %3 = vector.load %arg1[%2, %c0] : memref<32x32xbf16, #tpu.memory_space<vmem>>, vector<16x32xbf16>
    %cst = arith.constant 1.000000e+00 : bf16
    %4 = vector.broadcast %cst : bf16 to vector<16x32xbf16>
    %5 = arith.mulf %3, %4 : vector<16x32xbf16>
    %c0_0 = arith.constant 0 : index
    %c0_1 = arith.constant 0 : index
    %6 = vector.load %arg1[%c0_0, %c0_1] : memref<32x32xbf16, #tpu.memory_space<vmem>>, vector<32x32xbf16>
    %cst_2 = arith.constant dense<0.000000e+00> : vector<16x32xf32>
    %7 = tpu.matmul %5, %6, %cst_2 {dimension_numbers = #tpu.dot_dimension_numbers<[1], [1], [0], [0], [0, 0, 1, 0], [], []>} : vector<16x32xbf16>, vector<32x32xbf16>, vector<16x32xf32> -> vector<16x32xf32>
    %8 = tpu.iota {dimensions = array<i32: 1>} : vector<16x32xi32>
    %c16_i32_3 = arith.constant 16 : i32
    %9 = arith.muli %arg0, %c16_i32_3 : i32
    %10 = tpu.iota {dimensions = array<i32: 0>} : vector<16x1xi32>
    %11 = vector.broadcast %9 : i32 to vector<16x1xi32>
    %12 = arith.addi %11, %10 : vector<16x1xi32>
    %c16_i32_4 = arith.constant 16 : i32
    %13 = vector.broadcast %c16_i32_4 : i32 to vector<16x1xi32>
    %14 = arith.cmpi slt, %12, %13 : vector<16x1xi32>
    %c16_i32_5 = arith.constant 16 : i32
    %15 = vector.broadcast %c16_i32_5 : i32 to vector<16x1xi32>
    %16 = arith.addi %12, %15 : vector<16x1xi32>
    %c16_i32_6 = arith.constant 16 : i32
    %17 = vector.broadcast %c16_i32_6 : i32 to vector<16x1xi32>
    %18 = arith.subi %12, %17 : vector<16x1xi32>
    %19 = arith.select %14, %16, %18 : vector<16x1xi1>, vector<16x1xi32>
    %20 = vector.broadcast %19 : vector<16x1xi32> to vector<16x32xi32>
    %21 = arith.cmpi eq, %8, %20 : vector<16x32xi32>
    %cst_7 = arith.constant 0.000000e+00 : f32
    %22 = vector.broadcast %cst_7 : f32 to vector<16x32xf32>
    %23 = arith.select %21, %7, %22 : vector<16x32xi1>, vector<16x32xf32>
    %cst_8 = arith.constant dense<0.000000e+00> : vector<16xf32>
    %24 = vector.multi_reduction <add>, %23, %cst_8 [1] : vector<16x32xf32> to vector<16xf32>
    %25 = vector.shape_cast %24 : vector<16xf32> to vector<16x1xf32>
    %26 = vector.broadcast %12 : vector<16x1xi32> to vector<16x32xi32>
    %27 = arith.cmpi eq, %8, %26 : vector<16x32xi32>
    %cst_9 = arith.constant -1.000000e+30 : f32
    %28 = vector.broadcast %cst_9 : f32 to vector<16x32xf32>
    %29 = arith.select %27, %28, %7 : vector<16x32xi1>, vector<16x32xf32>
    %cst_10 = arith.constant dense<0xFF800000> : vector<16xf32>
    %30 = vector.multi_reduction <maximumf>, %29, %cst_10 [1] : vector<16x32xf32> to vector<16xf32>
    %31 = vector.shape_cast %30 : vector<16xf32> to vector<16x1xf32>
    %32 = vector.broadcast %31 : vector<16x1xf32> to vector<16x32xf32>
    %33 = arith.subf %29, %32 : vector<16x32xf32>
    %34 = math.exp %33 : vector<16x32xf32>
    %cst_11 = arith.constant dense<0.000000e+00> : vector<16xf32>
    %35 = vector.multi_reduction <add>, %34, %cst_11 [1] : vector<16x32xf32> to vector<16xf32>
    %36 = vector.shape_cast %35 : vector<16xf32> to vector<16x1xf32>
    %37 = math.log %36 : vector<16x1xf32>
    %38 = arith.addf %37, %31 : vector<16x1xf32>
    %39 = arith.subf %38, %25 : vector<16x1xf32>
    %c0_12 = arith.constant 0 : index
    %c0_13 = arith.constant 0 : index
    %40 = vector.load %arg2[%c0_12, %c0_13] : memref<16x1xf32, #tpu.memory_space<vmem>>, vector<16x1xf32>
    tpu.vector_store %arg2[%c0_12, %c0_13], %39 {strides = array<i32>} : memref<16x1xf32, #tpu.memory_space<vmem>>, vector<16x1xf32>,
    return
  }
  func.func @transform_0(%arg0: i32) -> (i32, i32) {
    %c0_i32 = arith.constant 0 : i32
    %c0_i32_0 = arith.constant 0 : i32
    %c0_i32_1 = arith.constant 0 : i32
    return %c0_i32, %c0_i32_0 : i32, i32
  }
  func.func @transform_1(%arg0: i32) -> (i32, i32) {
    %c0_i32 = arith.constant 0 : i32
    %c0_i32_0 = arith.constant 0 : i32
    return %arg0, %c0_i32 : i32, i32
  }
}

</mosaic_0001>

<llo_original>
// kernel: tpu_custom_call.1
$region0: #{tpu_custom_call.1}
  #allocation0 [shape = 'u32[]', space=smem, size = 0x4, offset = 0x4, fixed_abs, tag = 'smem constant byte address 0x4 - core index']
  #allocation1 [shape = 'u32[144,128]{1,0:T(1,128)}', space=vmem, size = 0x12000, scoped, tag = 'internal scratch']
  %s0 = inlined_call_operand.hbm [shape: bf16[32,32], index: 0, kind: input, shape index: {}]
  %s1 = inlined_call_operand.vmem [shape: f32[32,1], index: 1, kind: output, shape index: {}]
  %s2 = sld [smem:[#allocation0]]
  $region41: #{tpu_custom_call.1} parent=0
    _
  %s4 = ssub.s32 1, %s2
  %s5 = scalar_select 0, %s4, %s2
  $region1: #{tpu_custom_call.1} parent=0
    #allocation2 [shape = 'u8[8192]{0}', space=vmem, size = 0x2000, scoped, tag = 'input window, operand 0, single buffered']
    #allocation3 [shape = 's32[2]{0}', space=sflag, size = 0x8, scoped, tag = 'scoped memory for tpu_custom_call.1']
    %6 = vsyncpa [#allocation3], 0
    loop: start=0, step=1, limit=4
    $region2: #{tpu_custom_call.1} parent=1 // loop_pre_header
      _
    $region3: #{tpu_custom_call.1} parent=1 // loop_header
      %s8 = sphi 0, %s12
      %p9 = scmp.ge.s32.totalorder %s8, 4
      %s16 = sphi 0, %s16
      %s18 = sphi 0, %s16
      %s19 = sphi 0, %s18
      %s33 = sphi 0, %s19
      %s39 = sphi 0, %s41
      %s42 = sphi 0, %s39
      %s43 = sphi 0, %s42
      %s59 = sphi 0, %s43
    $region4: #{tpu_custom_call.1} parent=1 // loop_header_branch
      %11 = sbr.rel (%p9) target = $region8
    $region5: #{tpu_custom_call.1} parent=1 // loop_body
      %s13 = ssub.s32 %s8, 1
      %s14 = ssub.s32 %s8, 2
      %s15 = sadd.s32 %s8, 1
      %s17 = sadd.s32 %s16, 1
      %p20 = scmp.eq.s32.totalorder %s8, 1
      %p21 = scmp.ne.s32.totalorder %s16, %s18
      %p22 = scmp.eq.s32.totalorder %s8, 0
      %p23 = por %p21, %p22
      %p24 = scmp.ne.s32.totalorder %s16, %s18
      %p25 = scmp.eq.s32.totalorder %s13, 1
      %p26 = por %p24, %p25
      %p27 = scmp.ne.s32.totalorder %s18, %s19
      %p28 = scmp.eq.s32.totalorder %s13, 0
      %p29 = por %p27, %p28
      %p30 = scmp.ne.s32.totalorder %s18, %s19
      %p31 = scmp.eq.s32.totalorder %s14, 1
      %p32 = por %p30, %p31
      %p34 = scmp.ne.s32.totalorder %s19, %s33
      %p35 = scmp.eq.s32.totalorder %s14, 0
      %p36 = por %p34, %p35
      %s37 = ssub.s32 %s8, %s15
      %p38 = scmp.eq.s32.totalorder %s37, 0
      %s40 = sadd.s32 %s39, 1
      %s41 = scalar_select %p38, %s39, %s40
      %p44 = pneg %p38
      %p45 = scmp.eq.s32.totalorder %s8, 1
      %p46 = por %p44, %p45
      %p47 = scmp.ne.s32.totalorder %s39, %s42
      %p48 = scmp.eq.s32.totalorder %s8, 0
      %p49 = por %p47, %p48
      %p50 = scmp.ne.s32.totalorder %s39, %s42
      %p51 = scmp.eq.s32.totalorder %s13, 1
      %p52 = por %p50, %p51
      %p53 = scmp.ne.s32.totalorder %s42, %s43
      %p54 = scmp.eq.s32.totalorder %s13, 0
      %p55 = por %p53, %p54
      %p56 = scmp.ne.s32.totalorder %s42, %s43
      %p57 = scmp.eq.s32.totalorder %s14, 1
      %p58 = por %p56, %p57
      %p60 = scmp.ne.s32.totalorder %s43, %s59
      %p61 = scmp.eq.s32.totalorder %s14, 0
      %p62 = por %p60, %p61
      %p63 = scmp.le.s32.totalorder 1, %s8
      %p64 = scmp.lt.s32.totalorder %s8, 3
      %p65 = pnand %p63, %p64
      %p66 = pneg %p65
      // Predicated region
      $region9: #{tpu_custom_call.1} parent=5 // pred_check
        _
      $region10: #{tpu_custom_call.1} parent=5 // pred_check_branch
        %68 = sbr.rel (%p65) target = $region12
      $region11: #{tpu_custom_call.1} parent=5 // pred_region
        %s69 = ssub.s32 %s8, 1
        // Predicated region
        $region13: #{tpu_custom_call.1} parent=11 // pred_check
          %p70 = pneg %p29
        $region14: #{tpu_custom_call.1} parent=11 // pred_check_branch
          %72 = sbr.rel (%p70) target = $region16
        $region15: #{tpu_custom_call.1} parent=11 // pred_region
          %s74 = ssub.s32 256, 256
          %75 = vsyncadd [#allocation3], %s74
          %s76 = sshll.u32 [#allocation2], 4
          %s77 = int_to_ptr.vmem [resolvable:$true] %s76
          %82 = dma.hbm_to_vmem [thread:$0]  %s0, 256, %s77, [#allocation3], 64, 64, 4
        $region16: #{tpu_custom_call.1} parent=11 // pred_fallthru
          _
      $region12: #{tpu_custom_call.1} parent=5 // pred_fallthru
        _
      %p83 = scmp.lt.s32.totalorder %s8, 2
      // Predicated region
      $region17: #{tpu_custom_call.1} parent=5 // pred_check
        %p84 = pneg %p83
      $region18: #{tpu_custom_call.1} parent=5 // pred_check_branch
        %86 = sbr.rel (%p84) target = $region20
      $region19: #{tpu_custom_call.1} parent=5 // pred_region
        _
      $region20: #{tpu_custom_call.1} parent=5 // pred_fallthru
        _
      %p87 = scmp.le.s32.totalorder 1, %s8
      %p88 = scmp.lt.s32.totalorder %s8, 3
      %p89 = pnand %p87, %p88
      %p90 = pneg %p89
      // Predicated region
      $region21: #{tpu_custom_call.1} parent=5 // pred_check
        _
      $region22: #{tpu_custom_call.1} parent=5 // pred_check_branch
        %92 = sbr.rel (%p89) target = $region24
      $region23: #{tpu_custom_call.1} parent=5 // pred_region
        %s93 = ssub.s32 %s8, 1
        // Predicated region
        $region25: #{tpu_custom_call.1} parent=23 // pred_check
          %p94 = pneg %p29
        $region26: #{tpu_custom_call.1} parent=23 // pred_check_branch
          %96 = sbr.rel (%p94) target = $region28
        $region27: #{tpu_custom_call.1} parent=23 // pred_region
          %97 = dma.done [#allocation3], 256
        $region28: #{tpu_custom_call.1} parent=23 // pred_fallthru
          _
        %p98 = pneg %p29
        %p99 = pneg %p26
        %p100 = pneg %p55
        %p101 = pneg %p52
        %s102 = smul.u32 2, %s13
        %p103 = scmp.lt.s32.totalorder %s102, 3
        %s104 = scalar_select %p103, %s102, 3
        %s105 = smul.addr %s104, 8
        %s106 = scalar_lea.vmem %s1, %s105
        %s107 = smul.u32 2, %s13
        %p108 = scmp.lt.s32.totalorder %s107, 3
        %s109 = scalar_select %p108, %s107, 3
        %s110 = smul.addr %s109, 8
        %s111 = scalar_lea.vmem %s1, %s110
        %s112 = smul.u32 2, %s13
        %s114 = smul.u32 %s13, 16
        %s115 = sshra.s32 %s114, 3
        %s116 = sand.u32 %s114, 7
        %s117 = smul.addr %s115, 4
        %s118 = scalar_lea.vmem [#allocation2], %s117
        %v119 = vld [vmem:[%s118] sm:$0xf]
        %v120 = vld [vmem:[%s118 + $0x4] sm:$0xf]
        %v121 = vld [vmem:[#allocation2] sm:$0xf]
        %v122 = vld [vmem:[#allocation2 + $0x4] sm:$0xf]
        %v123 = vld [vmem:[#allocation2 + $0x8] sm:$0xf]
        %v124 = vld [vmem:[#allocation2 + $0xc] sm:$0xf]
        %v127 = vunpack.c.l.b16 %v119
        %v128 = vunpack.c.l.b16 %v120
        %v129 = vpack.c.b16 %v128, %v127
        %v134 = vunpack.c.l.b16 %v121
        %v135 = vunpack.c.l.b16 %v122
        %v136 = vunpack.c.l.b16 %v123
        %v137 = vunpack.c.l.b16 %v124
        %v138 = vpack.c.b16 %v135, %v134
        %v139 = vpack.c.b16 %v137, %v136
        %vm140 = vcmask 261120
        %v142 = vsel %vm140, %v129, 0
        %v145 = vsel %vm140, %v138, 0
        %v148 = vsel %vm140, %v139, 0
        %150 = vmatprep.subr.bf16.mxu0 0
        %151 = vmatpush1.bf16.xpose.msra.mxu0 %v145
        %152 = vmatprep.subr.bf16.mxu0 0
        %153 = vmatpush1.bf16.xpose.msra.mxu0 %v148
        %154 = vmatprep.subr.bf16.mxu0 0
        %155 = vmatpush1.bf16.xpose.msra.mxu0 0
        %156 = vmatprep.subr.bf16.mxu0 0
        %157 = vmatpush1.bf16.xpose.msra.mxu0 0
        %158 = vmatprep.subr.bf16.mxu0 0
        %159 = vmatpush1.bf16.xpose.msra.mxu0 0
        %160 = vmatprep.subr.bf16.mxu0 0
        %161 = vmatpush1.bf16.xpose.msra.mxu0 0
        %162 = vmatprep.subr.bf16.mxu0 0
        %163 = vmatpush1.bf16.xpose.msra.mxu0 0
        %164 = vmatprep.subr.bf16.mxu0 0
        %165 = vmatpush1.bf16.xpose.msra.mxu0 0
        %166 = vmatprep.subr.bf16.mxu0 0
        %167 = vmatpush1.bf16.xpose.msra.mxu0 0
        %168 = vmatprep.subr.bf16.mxu0 0
        %169 = vmatpush1.bf16.xpose.msra.mxu0 0
        %170 = vmatprep.subr.bf16.mxu0 0
        %171 = vmatpush1.bf16.xpose.msra.mxu0 0
        %172 = vmatprep.subr.bf16.mxu0 0
        %173 = vmatpush1.bf16.xpose.msra.mxu0 0
        %174 = vmatprep.subr.bf16.mxu0 0
        %175 = vmatpush1.bf16.xpose.msra.mxu0 0
        %176 = vmatprep.subr.bf16.mxu0 0
        %177 = vmatpush1.bf16.xpose.msra.mxu0 0
        %178 = vmatprep.subr.bf16.mxu0 0
        %179 = vmatpush1.bf16.xpose.msra.mxu0 0
        %180 = vmatprep.subr.bf16.mxu0 0
        %181 = vmatpush1.bf16.xpose.msra.mxu0 0
        %182 = vmatprep.mubr.bf16.mxu0 0
        %183 = vmatmul.mubr.bf16.gmra.mrb[0].mxu0 %v142
        %v184 = vpop.f32.mrb[0].mxu0
        %v185 = vadd.f32 0.0, %v184
        %v186 = vpop.f32.mrb[0].mxu0
        %v187 = vpop.f32.mrb[0].mxu0
        %v188 = vadd.f32 0.0, %v187
        %v189 = vpop.f32.mrb[0].mxu0
        %190 = vdwg.mxu0
        %v191 = vlaneseq
        %v192 = vand.u32 %v191, 127
        %v193 = vlaneseq
        %v194 = vshrl.u32 %v193, 7
        %v195 = vadd.s32 %v194, 8
        %v196 = vstv %s114
        %v197 = vadd.s32 %v196, %v194
        %v198 = vadd.s32 %v196, %v195
        %vm199 = vcmp.lt.s32.totalorder %v197, 16
        %vm200 = vcmp.lt.s32.totalorder %v198, 16
        %v201 = vadd.s32 %v197, 16
        %v202 = vadd.s32 %v198, 16
        %v203 = vsub.s32 %v197, 16
        %v204 = vsub.s32 %v198, 16
        %v205 = vsel %vm199, %v201, %v203
        %v206 = vsel %vm200, %v202, %v204
        %vm207 = vcmp.eq.s32.totalorder %v192, %v205
        %vm208 = vcmp.eq.s32.totalorder %v192, %v206
        %v209 = vsel %vm207, %v185, 0.0
        %v210 = vsel %vm208, %v188, 0.0
        %v211 = vsel %vm140, %v209, 0.0
        %212 = vadd.xlane.f32.xlu0 %v211
        %v213 = vpop.xlane.xlu0 %212
        %v214 = vsel %vm140, %v210, 0.0
        %215 = vadd.xlane.f32.xlu0 %v214
        %v216 = vpop.xlane.xlu0 %215
        %vm217 = vcmp.eq.s32.totalorder %v192, %v197
        %vm218 = vcmp.eq.s32.totalorder %v192, %v198
        %v219 = vsel %vm217, -1e+30, %v185
        %v220 = vsel %vm218, -1e+30, %v188
        %v221 = vsel %vm140, %v219, -inf
        %222 = vmax.xlane.f32.xlu0 %v221
        %v223 = vpop.xlane.xlu0 %222
        %v224 = vsel %vm140, %v220, -inf
        %225 = vmax.xlane.f32.xlu0 %v224
        %v226 = vpop.xlane.xlu0 %225
        %v227 = vsub.f32 %v219, %v223
        %v228 = vsub.f32 %v220, %v226
        %v229 = vmul.f32 %v227, 1.442695
        %v230 = vpow.pop %v229
        %v231 = vmul.f32 %v228, 1.442695
        %v232 = vpow.pop %v231
        %v233 = vsel %vm140, %v230, 0.0
        %234 = vadd.xlane.f32.xlu0 %v233
        %v235 = vpop.xlane.xlu0 %234
        %v236 = vsel %vm140, %v232, 0.0
        %237 = vadd.xlane.f32.xlu0 %v236
        %v238 = vpop.xlane.xlu0 %237
        %v239 = vlog2.pop %v235
        %v240 = vmul.f32 %v239, 0.6931472
        %v241 = vlog2.pop %v238
        %v242 = vmul.f32 %v241, 0.6931472
        %v243 = vadd.f32 %v240, %v223
        %v244 = vadd.f32 %v242, %v226
        %v245 = vsub.f32 %v243, %v213
        %v246 = vsub.f32 %v244, %v216
        %vm247 = vcmask 7168
        %248 = vst.msk [vmem:[%s111] sm:$0xff] %vm247, %v245
        %249 = vst.msk [vmem:[%s111 + $0x8] sm:$0xff] %vm247, %v246
        %s250 = smul.u32 2, %s13
        %p251 = scmp.lt.s32.totalorder %s250, 3
        %s252 = scalar_select %p251, %s250, 3
        %s253 = smul.addr %s252, 8
        %s254 = scalar_lea.vmem %s1, %s253
        // Predicated region
        $region29: #{tpu_custom_call.1} parent=23 // pred_check
          %p255 = pneg %p52
        $region30: #{tpu_custom_call.1} parent=23 // pred_check_branch
          %257 = sbr.rel (%p255) target = $region32
        $region31: #{tpu_custom_call.1} parent=23 // pred_region
          %s258 = smul.u32 2, %s13
        $region32: #{tpu_custom_call.1} parent=23 // pred_fallthru
          _
      $region24: #{tpu_custom_call.1} parent=5 // pred_fallthru
        _
      %p259 = scmp.le.s32.totalorder 2, %s8
      // Predicated region
      $region33: #{tpu_custom_call.1} parent=5 // pred_check
        %p260 = pneg %p259
      $region34: #{tpu_custom_call.1} parent=5 // pred_check_branch
        %262 = sbr.rel (%p260) target = $region36
      $region35: #{tpu_custom_call.1} parent=5 // pred_region
        %s263 = ssub.s32 %s8, 2
        // Predicated region
        $region37: #{tpu_custom_call.1} parent=35 // pred_check
          %p264 = pneg %p58
        $region38: #{tpu_custom_call.1} parent=35 // pred_check_branch
          %266 = sbr.rel (%p264) target = $region40
        $region39: #{tpu_custom_call.1} parent=35 // pred_region
          %s267 = smul.u32 2, %s14
          %p268 = scmp.lt.s32.totalorder %s267, 3
          %s269 = scalar_select %p268, %s267, 3
          %s270 = smul.addr %s269, 8
          %s271 = scalar_lea.vmem %s1, %s270
        $region40: #{tpu_custom_call.1} parent=35 // pred_fallthru
          _
      $region36: #{tpu_custom_call.1} parent=5 // pred_fallthru
        _
    $region6: #{tpu_custom_call.1} parent=1 // loop_footer
      %s12 = sadd.s32 1, %s8
    $region7: #{tpu_custom_call.1} parent=1 // loop_footer_branch
      %7 = sbr.rel target = $region3
    $region8: #{tpu_custom_call.1} parent=1 // loop_exit
      _
    %272 = vsyncpa [#allocation3], 1
    %s273 = scalar_lea.sflag [#allocation3], 1
    %274 = vsyncpa %s273, 1

</llo_original>
